<compile_context>
chip_gen: v5e
topology: v5e:2x2
jax: 0.10.0
libtpu: 0.0.40
codegen_flags: <defaults>
</compile_context>

<pallas_src>
import functools

import jax
import jax.numpy as jnp
from jax import lax
from jax.experimental import pallas as pl
from jax.experimental.pallas import tpu as pltpu


def _ibert_embeddings_kernel(
    # scalar prefetch (SMEM): flat word ids and position ids
    ids_sref, pos_sref,
    # inputs
    tt_ref,            # (TN, 1) int32   token-type ids for this tile (VMEM)
    wemb_hbm,          # (V, H)  f32     word embedding table (HBM)
    pemb_hbm,          # (P, H)  f32     position embedding table (HBM)
    temb_ref,          # (T, H)  f32     token-type table (VMEM resident)
    lnw_ref, lnb_ref,  # (1, H)  f32     LayerNorm weight / bias
    # output
    out_ref,           # (TN, H) f32
    # scratch
    wrows, prows,      # (TN, H) f32     gathered word / position rows
    sems,              # DMA semaphores (2,)
    *, eps):
    tn, h = out_ref.shape
    base = pl.program_id(0) * tn

    # 1) Issue per-token row-gather DMAs (word + position) HBM -> VMEM scratch.
    def issue(t, carry):
        wid = ids_sref[base + t]
        pid = pos_sref[base + t]
        pltpu.make_async_copy(wemb_hbm.at[pl.ds(wid, 1), :],
                              wrows.at[pl.ds(t, 1), :], sems.at[0]).start()
        pltpu.make_async_copy(pemb_hbm.at[pl.ds(pid, 1), :],
                              prows.at[pl.ds(t, 1), :], sems.at[1]).start()
        return carry
    lax.fori_loop(0, tn, issue, 0)

    # 2) Token-type embedding while the gather DMAs are in flight:
    #    T is tiny (2 for BERT) -> broadcast + VPU select instead of an MXU matmul.
    tt = tt_ref[...]                                   # (tn, 1) int32
    ttab = temb_ref[...]                               # (T, h)  f32
    tt_emb = jnp.broadcast_to(ttab[0:1, :], (tn, h))
    for t in range(1, ttab.shape[0]):
        tt_emb = jnp.where(tt == t, ttab[t:t + 1, :], tt_emb)

    # 3) Wait for all gathers (one same-sized wait per issued copy).
    def drain(t, carry):
        pltpu.make_async_copy(wemb_hbm.at[pl.ds(0, 1), :],
                              wrows.at[pl.ds(t, 1), :], sems.at[0]).wait()
        pltpu.make_async_copy(pemb_hbm.at[pl.ds(0, 1), :],
                              prows.at[pl.ds(t, 1), :], sems.at[1]).wait()
        return carry
    lax.fori_loop(0, tn, drain, 0)

    # 4) Sum the three embeddings + LayerNorm (single-pass stats:
    #    var = E[x^2] - mean^2; biased variance, same as nn.LayerNorm).
    emb = wrows[...] + prows[...] + tt_emb
    inv_h = 1.0 / float(h)
    s1 = jnp.sum(emb, axis=-1, keepdims=True)
    s2 = jnp.sum(emb * emb, axis=-1, keepdims=True)
    mean = s1 * inv_h
    var = s2 * inv_h - mean * mean
    xhat = (emb - mean) * lax.rsqrt(var + eps)
    # dropout -> identity at inference; output_activation (QuantAct, non-quant) -> identity
    out_ref[...] = (xhat * lnw_ref[...] + lnb_ref[...]).astype(out_ref.dtype)


def ibert_embeddings(input_ids, word_emb, tok_type_emb, pos_emb, ln_w, ln_b,
                     *, pad_token_id, layer_norm_eps, token_type_ids=None,
                     past_key_values_length=0, block_rows=256):
    """Returns (embeddings, embeddings_scaling_factor); the scaling factor is
    None in non-quant mode, matching the PyTorch module."""
    b, s = input_ids.shape
    h = word_emb.shape[1]
    if token_type_ids is None:
        token_type_ids = jnp.zeros((b, s), dtype=jnp.int32)

    # create_position_ids_from_input_ids (RoBERTa-style), plain JAX preamble.
    mask = (input_ids != pad_token_id).astype(jnp.int32)
    position_ids = (jnp.cumsum(mask, axis=1) + past_key_values_length) * mask + pad_token_id

    n = b * s
    # Row tile: multiple of 8 (sublane), capped at block_rows; pad N up to a tile multiple.
    tn = max(8, min(int(block_rows), ((n + 7) // 8) * 8))
    num_blocks = pl.cdiv(n, tn)
    n_pad = num_blocks * tn

    ids_flat = jnp.zeros((n_pad,), jnp.int32).at[:n].set(
        input_ids.reshape(n).astype(jnp.int32))
    pos_flat = jnp.zeros((n_pad,), jnp.int32).at[:n].set(
        position_ids.reshape(n).astype(jnp.int32))
    tt_col = jnp.zeros((n_pad, 1), jnp.int32).at[:n, 0].set(
        token_type_ids.reshape(n).astype(jnp.int32))

    wemb = word_emb.astype(jnp.float32)        # stays in HBM
    pemb = pos_emb.astype(jnp.float32)         # stays in HBM
    temb = tok_type_emb.astype(jnp.float32)    # tiny, VMEM resident
    lnw = ln_w.reshape(1, h).astype(jnp.float32)
    lnb = ln_b.reshape(1, h).astype(jnp.float32)

    # VMEM budget: 2 gather scratch tiles + double-buffered out/id tiles
    # + small resident tables + headroom for compiler-internal scratch.
    vmem_limit = int(
        2 * tn * h * 4                      # word + position gather scratch
        + 2 * (tn * h * 4 + tn * 128 * 4)   # double-buffered out tile + (tn,1) id tile (lane-padded)
        + (temb.size + 2 * h) * 4           # resident token-type table + LN params
        + (8 << 20))
    vmem_limit = min(vmem_limit, 100 * 1024 * 1024)

    T = temb.shape[0]
    kernel = functools.partial(_ibert_embeddings_kernel, eps=float(layer_norm_eps))

    grid_spec = pltpu.PrefetchScalarGridSpec(
        num_scalar_prefetch=2,                                   # ids_flat, pos_flat -> SMEM
        grid=(num_blocks,),
        in_specs=[
            pl.BlockSpec((tn, 1), lambda i, ids, pos: (i, 0)),   # token-type ids tile
            pl.BlockSpec(memory_space=pl.ANY),                   # word_emb: HBM, DMA gather
            pl.BlockSpec(memory_space=pl.ANY),                   # pos_emb:  HBM, DMA gather
            pl.BlockSpec((T, h), lambda i, ids, pos: (0, 0)),    # token-type table (resident)
            pl.BlockSpec((1, h), lambda i, ids, pos: (0, 0)),    # LN weight
            pl.BlockSpec((1, h), lambda i, ids, pos: (0, 0)),    # LN bias
        ],
        out_specs=pl.BlockSpec((tn, h), lambda i, ids, pos: (i, 0)),
        scratch_shapes=[
            pltpu.VMEM((tn, h), jnp.float32),   # gathered word rows
            pltpu.VMEM((tn, h), jnp.float32),   # gathered position rows
            pltpu.SemaphoreType.DMA((2,)),      # word / position DMA semaphores
        ],
    )

    out = pl.pallas_call(
        kernel,
        out_shape=jax.ShapeDtypeStruct((n_pad, h), jnp.float32),
        grid_spec=grid_spec,
        compiler_params=pltpu.CompilerParams(
            dimension_semantics=("parallel",),
            vmem_limit_bytes=vmem_limit,
        ),
    )(ids_flat, pos_flat, tt_col, wemb, pemb, temb, lnw, lnb)

    return out[:n].reshape(b, s, h), None   # scaling factor is None when quant_mode=False


if __name__ == "__main__":
    # Small synthetic config (H is a multiple of 128 so output stores are lane-dense).
    VOCAB = 64
    HIDDEN = 128
    TYPE_VOCAB = 2
    MAX_POS = 32
    PAD_ID = 1
    LN_EPS = 1e-12
    B, S = 2, 8

    key = jax.random.PRNGKey(0)
    k_w, k_t, k_p, k_g, k_b, k_ids = jax.random.split(key, 6)

    # nn.Embedding-style init; padding rows zeroed (as in QuantEmbedding w/ padding_idx).
    word_emb = 0.02 * jax.random.normal(k_w, (VOCAB, HIDDEN), jnp.float32)
    word_emb = word_emb.at[PAD_ID].set(0.0)
    tok_type_emb = 0.02 * jax.random.normal(k_t, (TYPE_VOCAB, HIDDEN), jnp.float32)
    pos_emb = 0.02 * jax.random.normal(k_p, (MAX_POS, HIDDEN), jnp.float32)
    pos_emb = pos_emb.at[PAD_ID].set(0.0)
    ln_w = jnp.ones((HIDDEN,), jnp.float32) + 0.01 * jax.random.normal(k_g, (HIDDEN,), jnp.float32)
    ln_b = 0.01 * jax.random.normal(k_b, (HIDDEN,), jnp.float32)

    # Example inputs (some trailing padding; nontrivial token types to exercise the select).
    input_ids = jax.random.randint(k_ids, (B, S), 2, VOCAB, dtype=jnp.int32)
    input_ids = input_ids.at[0, S - 2:].set(PAD_ID)
    input_ids = input_ids.at[1, S - 1:].set(PAD_ID)
    token_type_ids = jnp.zeros((B, S), jnp.int32).at[:, S // 2:].set(1)

    embeddings, scaling_factor = ibert_embeddings(
        input_ids, word_emb, tok_type_emb, pos_emb, ln_w, ln_b,
        pad_token_id=PAD_ID, layer_norm_eps=LN_EPS,
        token_type_ids=token_type_ids)
    jax.block_until_ready(embeddings)

    # Pure-JAX reference of the same math.
    mask = (input_ids != PAD_ID).astype(jnp.int32)
    position_ids = jnp.cumsum(mask, axis=1) * mask + PAD_ID
    ref = word_emb[input_ids] + tok_type_emb[token_type_ids] + pos_emb[position_ids]
    mu = ref.mean(-1, keepdims=True)
    var = ((ref - mu) ** 2).mean(-1, keepdims=True)
    ref = (ref - mu) / jnp.sqrt(var + LN_EPS) * ln_w + ln_b

    assert embeddings.shape == (B, S, HIDDEN)
    assert scaling_factor is None
    assert jnp.allclose(embeddings, ref, atol=1e-4, rtol=1e-4), \
        float(jnp.max(jnp.abs(embeddings - ref)))
    print("KERNEL_OK")
</pallas_src>

<mosaic_0001>
module attributes {stable_mosaic.version = 11 : i64} {
  func.func @_ibert_embeddings_kernel(%arg0: i32, %arg1: memref<16xi32, #tpu.memory_space<smem>>, %arg2: memref<16xi32, #tpu.memory_space<smem>>, %arg3: memref<16x1xi32, #tpu.memory_space<vmem>>, %arg4: memref<64x128xf32, #tpu.memory_space<any>>, %arg5: memref<32x128xf32, #tpu.memory_space<any>>, %arg6: memref<2x128xf32, #tpu.memory_space<vmem>>, %arg7: memref<1x128xf32, #tpu.memory_space<vmem>>, %arg8: memref<1x128xf32, #tpu.memory_space<vmem>>, %arg9: memref<16x128xf32, #tpu.memory_space<vmem>>, %arg10: memref<16x128xf32, #tpu.memory_space<vmem>>, %arg11: memref<16x128xf32, #tpu.memory_space<vmem>>, %arg12: memref<2x!tpu.dma_semaphore, #tpu.memory_space<semaphore_mem>>) attributes {dimension_semantics = [#tpu.dimension_semantics<parallel>], iteration_bounds = array<i64: 1>, scalar_prefetch = 2 : i64, scratch_operands = 3 : i64, tpu.core_type = #tpu.core_type<tc>, window_params = [{transform_indices = @transform_0, window_bounds = array<i64: 16, 1>}, {}, {}, {pipeline_mode = #tpu.pipeline_mode<synchronous>, transform_indices = @transform_3, window_bounds = array<i64: 2, 128>}, {pipeline_mode = #tpu.pipeline_mode<synchronous>, transform_indices = @transform_4, window_bounds = array<i64: 1, 128>}, {pipeline_mode = #tpu.pipeline_mode<synchronous>, transform_indices = @transform_5, window_bounds = array<i64: 1, 128>}, {transform_indices = @transform_6, window_bounds = array<i64: 16, 128>}]} {
    %c16_i32 = arith.constant 16 : i32
    %0 = arith.muli %arg0, %c16_i32 : i32
    %c0_i32 = arith.constant 0 : i32
    %c16_i32_0 = arith.constant 16 : i32
    %1 = arith.addi %c0_i32, %c16_i32_0 : i32
    %c1_i32 = arith.constant 1 : i32
    scf.for %arg13 = %c0_i32 to %1 step %c1_i32  : i32 {
      %45 = arith.addi %0, %arg13 : i32
      %46 = arith.index_cast %45 : i32 to index
      %47 = memref.load %arg1[%46] : memref<16xi32, #tpu.memory_space<smem>>
      %48 = arith.addi %0, %arg13 : i32
      %49 = arith.index_cast %48 : i32 to index
      %50 = memref.load %arg2[%49] : memref<16xi32, #tpu.memory_space<smem>>
      %c0_i32_24 = arith.constant 0 : i32
      %c0_i32_25 = arith.constant 0 : i32
      %51 = tpu.memref_slice %arg4[%47, %c0_i32_25] : memref<64x128xf32, #tpu.memory_space<any>> -> memref<1x128xf32, #tpu.memory_space<any>>
      %c0_i32_26 = arith.constant 0 : i32
      %52 = tpu.memref_slice %arg10[%arg13, %c0_i32_26] : memref<16x128xf32, #tpu.memory_space<vmem>> -> memref<1x128xf32, #tpu.memory_space<vmem>>
      %53 = tpu.memref_slice %arg12[%c0_i32_24] : memref<2x!tpu.dma_semaphore, #tpu.memory_space<semaphore_mem>> -> memref<1x!tpu.dma_semaphore, #tpu.memory_space<semaphore_mem>>
      %54 = tpu.memref_squeeze %53 : memref<1x!tpu.dma_semaphore, #tpu.memory_space<semaphore_mem>> -> memref<!tpu.dma_semaphore, #tpu.memory_space<semaphore_mem>>
      tpu.enqueue_dma source(%51 : memref<1x128xf32, #tpu.memory_space<any>>) target(%52 : memref<1x128xf32, #tpu.memory_space<vmem>>) target_semaphore(%54 : memref<!tpu.dma_semaphore, #tpu.memory_space<semaphore_mem>>)
      %c1_i32_27 = arith.constant 1 : i32
      %c0_i32_28 = arith.constant 0 : i32
      %55 = tpu.memref_slice %arg5[%50, %c0_i32_28] : memref<32x128xf32, #tpu.memory_space<any>> -> memref<1x128xf32, #tpu.memory_space<any>>
      %c0_i32_29 = arith.constant 0 : i32
      %56 = tpu.memref_slice %arg11[%arg13, %c0_i32_29] : memref<16x128xf32, #tpu.memory_space<vmem>> -> memref<1x128xf32, #tpu.memory_space<vmem>>
      %57 = tpu.memref_slice %arg12[%c1_i32_27] : memref<2x!tpu.dma_semaphore, #tpu.memory_space<semaphore_mem>> -> memref<1x!tpu.dma_semaphore, #tpu.memory_space<semaphore_mem>>
      %58 = tpu.memref_squeeze %57 : memref<1x!tpu.dma_semaphore, #tpu.memory_space<semaphore_mem>> -> memref<!tpu.dma_semaphore, #tpu.memory_space<semaphore_mem>>
      tpu.enqueue_dma source(%55 : memref<1x128xf32, #tpu.memory_space<any>>) target(%56 : memref<1x128xf32, #tpu.memory_space<vmem>>) target_semaphore(%58 : memref<!tpu.dma_semaphore, #tpu.memory_space<semaphore_mem>>)
    }
    %c16_i32_1 = arith.constant 16 : i32
    %c0 = arith.constant 0 : index
    %c0_2 = arith.constant 0 : index
    %2 = vector.load %arg3[%c0, %c0_2] : memref<16x1xi32, #tpu.memory_space<vmem>>, vector<16x1xi32>
    %c0_3 = arith.constant 0 : index
    %c0_4 = arith.constant 0 : index
    %3 = vector.load %arg6[%c0_3, %c0_4] : memref<2x128xf32, #tpu.memory_space<vmem>>, vector<2x128xf32>
    %4 = vector.extract_strided_slice %3 {offsets = [0, 0], sizes = [1, 128], strides = [1, 1]} : vector<2x128xf32> to vector<1x128xf32>
    %5 = vector.shape_cast %4 : vector<1x128xf32> to vector<1x128xf32>
    %6 = vector.broadcast %5 : vector<1x128xf32> to vector<16x128xf32>
    %c1_i32_5 = arith.constant 1 : i32
    %7 = vector.broadcast %c1_i32_5 : i32 to vector<16x1xi32>
    %8 = arith.cmpi eq, %2, %7 : vector<16x1xi32>
    %9 = vector.extract_strided_slice %3 {offsets = [1, 0], sizes = [1, 128], strides = [1, 1]} : vector<2x128xf32> to vector<1x128xf32>
    %10 = vector.shape_cast %8 : vector<16x1xi1> to vector<16x1xi1>
    %11 = vector.broadcast %10 : vector<16x1xi1> to vector<16x128xi1>
    %12 = vector.shape_cast %9 : vector<1x128xf32> to vector<1x128xf32>
    %13 = vector.broadcast %12 : vector<1x128xf32> to vector<16x128xf32>
    %14 = arith.select %11, %13, %6 : vector<16x128xi1>, vector<16x128xf32>
    %c0_i32_6 = arith.constant 0 : i32
    %c16_i32_7 = arith.constant 16 : i32
    %15 = arith.addi %c0_i32_6, %c16_i32_7 : i32
    %c1_i32_8 = arith.constant 1 : i32
    scf.for %arg13 = %c0_i32_6 to %15 step %c1_i32_8  : i32 {
      %c0_i32_24 = arith.constant 0 : i32
      %c0_i32_25 = arith.constant 0 : i32
      %c0_i32_26 = arith.constant 0 : i32
      %45 = tpu.memref_slice %arg4[%c0_i32_25, %c0_i32_26] : memref<64x128xf32, #tpu.memory_space<any>> -> memref<1x128xf32, #tpu.memory_space<any>>
      %c0_i32_27 = arith.constant 0 : i32
      %46 = tpu.memref_slice %arg10[%arg13, %c0_i32_27] : memref<16x128xf32, #tpu.memory_space<vmem>> -> memref<1x128xf32, #tpu.memory_space<vmem>>
      %47 = tpu.memref_slice %arg12[%c0_i32_24] : memref<2x!tpu.dma_semaphore, #tpu.memory_space<semaphore_mem>> -> memref<1x!tpu.dma_semaphore, #tpu.memory_space<semaphore_mem>>
      %48 = tpu.memref_squeeze %47 : memref<1x!tpu.dma_semaphore, #tpu.memory_space<semaphore_mem>> -> memref<!tpu.dma_semaphore, #tpu.memory_space<semaphore_mem>>
      tpu.wait_dma2 semaphore(%48 : memref<!tpu.dma_semaphore, #tpu.memory_space<semaphore_mem>>) src(%45 : memref<1x128xf32, #tpu.memory_space<any>>) dst(%46 : memref<1x128xf32, #tpu.memory_space<vmem>>)
      %c1_i32_28 = arith.constant 1 : i32
      %c0_i32_29 = arith.constant 0 : i32
      %c0_i32_30 = arith.constant 0 : i32
      %49 = tpu.memref_slice %arg5[%c0_i32_29, %c0_i32_30] : memref<32x128xf32, #tpu.memory_space<any>> -> memref<1x128xf32, #tpu.memory_space<any>>
      %c0_i32_31 = arith.constant 0 : i32
      %50 = tpu.memref_slice %arg11[%arg13, %c0_i32_31] : memref<16x128xf32, #tpu.memory_space<vmem>> -> memref<1x128xf32, #tpu.memory_space<vmem>>
      %51 = tpu.memref_slice %arg12[%c1_i32_28] : memref<2x!tpu.dma_semaphore, #tpu.memory_space<semaphore_mem>> -> memref<1x!tpu.dma_semaphore, #tpu.memory_space<semaphore_mem>>
      %52 = tpu.memref_squeeze %51 : memref<1x!tpu.dma_semaphore, #tpu.memory_space<semaphore_mem>> -> memref<!tpu.dma_semaphore, #tpu.memory_space<semaphore_mem>>
      tpu.wait_dma2 semaphore(%52 : memref<!tpu.dma_semaphore, #tpu.memory_space<semaphore_mem>>) src(%49 : memref<1x128xf32, #tpu.memory_space<any>>) dst(%50 : memref<1x128xf32, #tpu.memory_space<vmem>>)
    }
    %c16_i32_9 = arith.constant 16 : i32
    %c0_10 = arith.constant 0 : index
    %c0_11 = arith.constant 0 : index
    %16 = vector.load %arg10[%c0_10, %c0_11] : memref<16x128xf32, #tpu.memory_space<vmem>>, vector<16x128xf32>
    %c0_12 = arith.constant 0 : index
    %c0_13 = arith.constant 0 : index
    %17 = vector.load %arg11[%c0_12, %c0_13] : memref<16x128xf32, #tpu.memory_space<vmem>>, vector<16x128xf32>
    %18 = arith.addf %16, %17 : vector<16x128xf32>
    %19 = arith.addf %18, %14 : vector<16x128xf32>
    %cst = arith.constant dense<0.000000e+00> : vector<16xf32>
    %20 = vector.multi_reduction <add>, %19, %cst [1] : vector<16x128xf32> to vector<16xf32>
    %21 = vector.shape_cast %20 : vector<16xf32> to vector<16x1xf32>
    %22 = arith.mulf %19, %19 : vector<16x128xf32>
    %cst_14 = arith.constant dense<0.000000e+00> : vector<16xf32>
    %23 = vector.multi_reduction <add>, %22, %cst_14 [1] : vector<16x128xf32> to vector<16xf32>
    %24 = vector.shape_cast %23 : vector<16xf32> to vector<16x1xf32>
    %cst_15 = arith.constant 7.812500e-03 : f32
    %25 = vector.broadcast %cst_15 : f32 to vector<16x1xf32>
    %26 = arith.mulf %21, %25 : vector<16x1xf32>
    %cst_16 = arith.constant 7.812500e-03 : f32
    %27 = vector.broadcast %cst_16 : f32 to vector<16x1xf32>
    %28 = arith.mulf %24, %27 : vector<16x1xf32>
    %29 = arith.mulf %26, %26 : vector<16x1xf32>
    %30 = arith.subf %28, %29 : vector<16x1xf32>
    %31 = vector.broadcast %26 : vector<16x1xf32> to vector<16x128xf32>
    %32 = arith.subf %19, %31 : vector<16x128xf32>
    %cst_17 = arith.constant 9.99999996E-13 : f32
    %33 = vector.broadcast %cst_17 : f32 to vector<16x1xf32>
    %34 = arith.addf %30, %33 : vector<16x1xf32>
    %35 = math.rsqrt %34 : vector<16x1xf32>
    %36 = vector.broadcast %35 : vector<16x1xf32> to vector<16x128xf32>
    %37 = arith.mulf %32, %36 : vector<16x128xf32>
    %c0_18 = arith.constant 0 : index
    %c0_19 = arith.constant 0 : index
    %38 = vector.load %arg7[%c0_18, %c0_19] : memref<1x128xf32, #tpu.memory_space<vmem>>, vector<1x128xf32>
    %39 = vector.broadcast %38 : vector<1x128xf32> to vector<16x128xf32>
    %40 = arith.mulf %37, %39 : vector<16x128xf32>
    %c0_20 = arith.constant 0 : index
    %c0_21 = arith.constant 0 : index
    %41 = vector.load %arg8[%c0_20, %c0_21] : memref<1x128xf32, #tpu.memory_space<vmem>>, vector<1x128xf32>
    %42 = vector.broadcast %41 : vector<1x128xf32> to vector<16x128xf32>
    %43 = arith.addf %40, %42 : vector<16x128xf32>
    %c0_22 = arith.constant 0 : index
    %c0_23 = arith.constant 0 : index
    %44 = vector.load %arg9[%c0_22, %c0_23] : memref<16x128xf32, #tpu.memory_space<vmem>>, vector<16x128xf32>
    tpu.vector_store %arg9[%c0_22, %c0_23], %43 {strides = array<i32>} : memref<16x128xf32, #tpu.memory_space<vmem>>, vector<16x128xf32>,
    return
  }
  func.func @transform_0(%arg0: i32, %arg1: memref<16xi32, #tpu.memory_space<smem>>, %arg2: memref<16xi32, #tpu.memory_space<smem>>) -> (i32, i32) {
    %c0_i32 = arith.constant 0 : i32
    %c0_i32_0 = arith.constant 0 : i32
    return %arg0, %c0_i32 : i32, i32
  }
  func.func @transform_3(%arg0: i32, %arg1: memref<16xi32, #tpu.memory_space<smem>>, %arg2: memref<16xi32, #tpu.memory_space<smem>>) -> (i32, i32) {
    %c0_i32 = arith.constant 0 : i32
    %c0_i32_0 = arith.constant 0 : i32
    %c0_i32_1 = arith.constant 0 : i32
    return %c0_i32, %c0_i32_0 : i32, i32
  }
  func.func @transform_4(%arg0: i32, %arg1: memref<16xi32, #tpu.memory_space<smem>>, %arg2: memref<16xi32, #tpu.memory_space<smem>>) -> (i32, i32) {
    %c0_i32 = arith.constant 0 : i32
    %c0_i32_0 = arith.constant 0 : i32
    %c0_i32_1 = arith.constant 0 : i32
    return %c0_i32, %c0_i32_0 : i32, i32
  }
  func.func @transform_5(%arg0: i32, %arg1: memref<16xi32, #tpu.memory_space<smem>>, %arg2: memref<16xi32, #tpu.memory_space<smem>>) -> (i32, i32) {
    %c0_i32 = arith.constant 0 : i32
    %c0_i32_0 = arith.constant 0 : i32
    %c0_i32_1 = arith.constant 0 : i32
    return %c0_i32, %c0_i32_0 : i32, i32
  }
  func.func @transform_6(%arg0: i32, %arg1: memref<16xi32, #tpu.memory_space<smem>>, %arg2: memref<16xi32, #tpu.memory_space<smem>>) -> (i32, i32) {
    %c0_i32 = arith.constant 0 : i32
    %c0_i32_0 = arith.constant 0 : i32
    return %arg0, %c0_i32 : i32, i32
  }
}

</mosaic_0001>

<llo_original>
// kernel: tpu_custom_call.1
$region0: #{tpu_custom_call.1}
  #allocation0 [shape = 'u32[]', space=smem, size = 0x4, offset = 0x4, fixed_abs, tag = 'smem constant byte address 0x4 - core index']
  #allocation1 [shape = 'u32[72,128]{1,0:T(1,128)}', space=vmem, size = 0x9000, scoped, tag = 'internal scratch']
  #allocation2 [shape = 'f32[16,128]{1,0:T(8,128)}', space=vmem, size = 0x2000, scoped, tag = 'scratch operand']
  #allocation3 [shape = 'f32[16,128]{1,0:T(8,128)}', space=vmem, size = 0x2000, scoped, tag = 'scratch operand']
  #allocation4 [shape = 's32[2]{0}', space=sflag, size = 0x8, scoped, tag = 'scratch operand']
  #allocation5 [shape = 's32[1]{0}', space=sflag, size = 0x4, scoped, tag = 'scoped memory for tpu_custom_call.1']
  #allocation6 [shape = 'u8[512]{0}', space=smem, size = 0x200, scoped, tag = 'prefetched SMEM operand 0']
  #allocation7 [shape = 'u8[512]{0}', space=smem, size = 0x200, scoped, tag = 'prefetched SMEM operand 1']
  #allocation10 [shape = 's32[]', space=sflag, size = 0x4, offset = 0, fixed_abs, tag = 'sflag constant byte address 0x0 - dummy sync flag']
  #allocation11 [shape = 's32[]', space=sflag, size = 0x4, offset = 0, fixed_abs, tag = 'sflag constant byte address 0x0 - dummy sync flag']
  #allocation12 [shape = 'u32[]', space=smem, size = 0x4, offset = 0x44, fixed_abs, tag = 'smem constant byte address 0x44 - assertion arg 0']
  #allocation13 [shape = 'u32[]', space=smem, size = 0x4, offset = 0x48, fixed_abs, tag = 'smem constant byte address 0x48 - assertion arg 1']
  #allocation14 [shape = 's32[]', space=sflag, size = 0x4, offset = 0, fixed_abs, tag = 'sflag constant byte address 0x0 - dummy sync flag']
  #allocation15 [shape = 's32[]', space=sflag, size = 0x4, offset = 0, fixed_abs, tag = 'sflag constant byte address 0x0 - dummy sync flag']
  %s0 = inlined_call_operand.vmem [shape: s32[16], index: 0, kind: input, shape index: {}]
  %s1 = inlined_call_operand.vmem [shape: s32[16], index: 1, kind: input, shape index: {}]
  %s2 = inlined_call_operand.vmem [shape: s32[16,1], index: 2, kind: input, shape index: {}]
  %s3 = inlined_call_operand.hbm [shape: f32[64,128], index: 3, kind: input, shape index: {}]
  %s4 = inlined_call_operand.hbm [shape: f32[32,128], index: 4, kind: input, shape index: {}]
  %s5 = inlined_call_operand.vmem [shape: f32[2,128], index: 5, kind: input, shape index: {}]
  %s6 = inlined_call_operand.vmem [shape: f32[1,128], index: 6, kind: input, shape index: {}]
  %s7 = inlined_call_operand.vmem [shape: f32[1,128], index: 7, kind: input, shape index: {}]
  %s8 = inlined_call_operand.hbm [shape: f32[16,128], index: 8, kind: output, shape index: {}]
  %s9 = sld [smem:[#allocation0]]
  $region48: #{tpu_custom_call.1} parent=0
    _
  %s11 = ssub.s32 1, %s9
  %s12 = scalar_select 0, %s11, %s9
  %s14 = sshll.u32 %s0, 4
  %s15 = int_to_ptr.vmem [resolvable:$true] %s14
  %17 = dma.vmem_to_smem %s15, 16, [#allocation6], [#allocation5]
  %s19 = sshll.u32 %s1, 4
  %s20 = int_to_ptr.vmem [resolvable:$true] %s19
  %22 = dma.vmem_to_smem %s20, 16, [#allocation7], [#allocation5]
  %24 = dma.done [#allocation5], 32
  %25 = sfence
  $region1: #{tpu_custom_call.1} parent=0
    #allocation8 [shape = 'u8[8192]{0}', space=vmem, size = 0x2000, scoped, tag = 'output window, operand 0, single buffered']
    #allocation9 [shape = 's32[1]{0}', space=sflag, size = 0x4, scoped, tag = 'scoped memory for tpu_custom_call.1']
    %26 = vsyncpa [#allocation9], 0
    // Predicated region
    $region2: #{tpu_custom_call.1} parent=1 // pred_check
      _
    $region3: #{tpu_custom_call.1} parent=1 // pred_check_branch
      %28 = sbr.rel (0) target = $region5
    $region4: #{tpu_custom_call.1} parent=1 // pred_region
      _
    $region5: #{tpu_custom_call.1} parent=1 // pred_fallthru
      _
    // Predicated region
    $region6: #{tpu_custom_call.1} parent=1 // pred_check
      _
    $region7: #{tpu_custom_call.1} parent=1 // pred_check_branch
      %30 = sbr.rel (0) target = $region9
    $region8: #{tpu_custom_call.1} parent=1 // pred_region
      _
    $region9: #{tpu_custom_call.1} parent=1 // pred_fallthru
      _
    // Predicated region
    $region10: #{tpu_custom_call.1} parent=1 // pred_check
      _
    $region11: #{tpu_custom_call.1} parent=1 // pred_check_branch
      %32 = sbr.rel (0) target = $region13
    $region12: #{tpu_custom_call.1} parent=1 // pred_region
      _
    $region13: #{tpu_custom_call.1} parent=1 // pred_fallthru
      _
    // Predicated region
    $region14: #{tpu_custom_call.1} parent=1 // pred_check
      _
    $region15: #{tpu_custom_call.1} parent=1 // pred_check_branch
      %34 = sbr.rel (0) target = $region17
    $region16: #{tpu_custom_call.1} parent=1 // pred_region
      _
    $region17: #{tpu_custom_call.1} parent=1 // pred_fallthru
      _
    %s35 = smul.u32 0, 16
    loop: start=0, step=1, limit=16
    $region18: #{tpu_custom_call.1} parent=1 // loop_pre_header
      _
    $region19: #{tpu_custom_call.1} parent=1 // loop_header
      %s37 = sphi 0, %s41
      %p38 = scmp.ge.s32.totalorder %s37, 16
    $region20: #{tpu_custom_call.1} parent=1 // loop_header_branch
      %40 = sbr.rel (%p38) target = $region24
    $region21: #{tpu_custom_call.1} parent=1 // loop_body
      %s42 = sadd.s32 %s35, %s37
      %s43 = sld [smem:[#allocation6 + %s42]]
      %s44 = sld [smem:[#allocation7 + %s42]]
      %s45 = scalar_lea.hbm %s3, %s43
      %s46 = scalar_lea.vmem [#allocation2], %s37
      // Predicated region
      $region25: #{tpu_custom_call.1} parent=21 // pred_check
        _
      $region26: #{tpu_custom_call.1} parent=21 // pred_check_branch
        %48 = sbr.rel target = $region28
      $region27: #{tpu_custom_call.1} parent=21 // pred_region
        %49 = sst [smem:[#allocation12]] [#allocation11]
        %50 = sst [smem:[#allocation13]] [#allocation10]
      $region28: #{tpu_custom_call.1} parent=21 // pred_fallthru
        _
      %52 = shalt.err (0)
      %s54 = sshll.u32 %s45, 4
      %s55 = int_to_ptr.hbm [resolvable:$true] %s54
      %s56 = sshll.u32 %s46, 4
      %s57 = int_to_ptr.vmem [resolvable:$true] %s56
      %59 = dma.hbm_to_vmem [thread:$0]  %s55, 16, %s57, [#allocation4]
      %s60 = scalar_lea.hbm %s4, %s44
      %s61 = scalar_lea.vmem [#allocation3], %s37
      %s62 = scalar_lea.sflag [#allocation4], 1
      // Predicated region
      $region29: #{tpu_custom_call.1} parent=21 // pred_check
        _
      $region30: #{tpu_custom_call.1} parent=21 // pred_check_branch
        %64 = sbr.rel target = $region32
      $region31: #{tpu_custom_call.1} parent=21 // pred_region
        %65 = sst [smem:[#allocation12]] [#allocation15]
        %66 = sst [smem:[#allocation13]] [#allocation14]
      $region32: #{tpu_custom_call.1} parent=21 // pred_fallthru
        _
      %68 = shalt.err (0)
      %s70 = sshll.u32 %s60, 4
      %s71 = int_to_ptr.hbm [resolvable:$true] %s70
      %s72 = sshll.u32 %s61, 4
      %s73 = int_to_ptr.vmem [resolvable:$true] %s72
      %75 = dma.hbm_to_vmem [thread:$0]  %s71, 16, %s73, %s62
    $region22: #{tpu_custom_call.1} parent=1 // loop_footer
      %s41 = sadd.s32 1, %s37
    $region23: #{tpu_custom_call.1} parent=1 // loop_footer_branch
      %36 = sbr.rel target = $region19
    $region24: #{tpu_custom_call.1} parent=1 // loop_exit
      _
    %v76 = vld [vmem:[%s2] sm:$0xff]
    %v77 = vld [vmem:[%s2 + $0x8] sm:$0xff]
    %v78 = vld [vmem:[%s5] sm:$0x3]
    %v79 = vperm.slane %v78, 0
    %vm80 = vcmp.eq.s32.totalorder %v76, 1
    %vm81 = vcmp.eq.s32.totalorder %v77, 1
    %v82 = vsel %vm80, 1, 0
    %v83 = vsel %vm81, 1, 0
    %84 = vset.pattern.permute.xlu0 0
    %85 = vperm.xlu0 %84, %v82
    %v86 = vpop.permute.xlu0 %85
    %87 = vset.pattern.permute.xlu0 0
    %88 = vperm.xlu0 %87, %v83
    %v89 = vpop.permute.xlu0 %88
    %vm90 = vcmp.eq.s32.totalorder %v86, 1
    %vm91 = vcmp.eq.s32.totalorder %v89, 1
    %v92 = vperm.slane %v78, 1
    %v93 = vsel %vm90, %v92, %v79
    %v94 = vsel %vm91, %v92, %v79
    loop: start=0, step=1, limit=16
    $region33: #{tpu_custom_call.1} parent=1 // loop_pre_header
      _
    $region34: #{tpu_custom_call.1} parent=1 // loop_header
      %s96 = sphi 0, %s100
      %p97 = scmp.ge.s32.totalorder %s96, 16
    $region35: #{tpu_custom_call.1} parent=1 // loop_header_branch
      %99 = sbr.rel (%p97) target = $region39
    $region36: #{tpu_custom_call.1} parent=1 // loop_body
      %s101 = smul.u32 1, 1
      %s102 = sshll.u32 %s101, 4
      %103 = dma.done [#allocation4], %s102
      %s104 = scalar_lea.sflag [#allocation4], 1
      %s105 = sshll.u32 %s101, 4
      %106 = dma.done %s104, %s105
    $region37: #{tpu_custom_call.1} parent=1 // loop_footer
      %s100 = sadd.s32 1, %s96
    $region38: #{tpu_custom_call.1} parent=1 // loop_footer_branch
      %95 = sbr.rel target = $region34
    $region39: #{tpu_custom_call.1} parent=1 // loop_exit
      _
    %v107 = vld [vmem:[#allocation2] sm:$0xff]
    %v108 = vld [vmem:[#allocation2 + $0x8] sm:$0xff]
    %v109 = vld [vmem:[#allocation3] sm:$0xff]
    %v110 = vld [vmem:[#allocation3 + $0x8] sm:$0xff]
    %v111 = vadd.f32 %v107, %v109
    %v112 = vadd.f32 %v108, %v110
    %v113 = vadd.f32 %v111, %v93
    %v114 = vadd.f32 %v112, %v94
    %115 = vadd.xlane.f32.xlu0 %v113
    %v116 = vpop.xlane.xlu0 %115
    %117 = vadd.xlane.f32.xlu0 %v114
    %v118 = vpop.xlane.xlu0 %117
    %v119 = vmul.f32 %v113, %v113
    %v120 = vmul.f32 %v114, %v114
    %121 = vadd.xlane.f32.xlu0 %v119
    %v122 = vpop.xlane.xlu0 %121
    %123 = vadd.xlane.f32.xlu0 %v120
    %v124 = vpop.xlane.xlu0 %123
    %v125 = vmul.f32 %v116, 0.0078125
    %v126 = vmul.f32 %v118, 0.0078125
    %v127 = vmul.f32 %v122, 0.0078125
    %v128 = vmul.f32 %v124, 0.0078125
    %v129 = vmul.f32 %v125, %v125
    %v130 = vmul.f32 %v126, %v126
    %v131 = vsub.f32 %v127, %v129
    %v132 = vsub.f32 %v128, %v130
    %v133 = vsub.f32 %v113, %v125
    %v134 = vsub.f32 %v114, %v126
    %v135 = vadd.f32 %v131, 1e-12
    %v136 = vadd.f32 %v132, 1e-12
    %v137 = vrsqrt.pop %v135
    %v138 = vmul.f32 %v137, %v135
    %v139 = vmul.f32 %v138, %v137
    %v140 = vmul.f32 0.5, %v139
    %v141 = vsub.f32 1.5, %v140
    %v142 = vmul.f32 %v137, %v141
    %vm143 = vweird.f32 %v135
    %vm144 = vweird.f32 %v137
    %vm145 = vmor %vm143, %vm144
    %v146 = vsel %vm145, %v137, %v142
    %v147 = vrsqrt.pop %v136
    %v148 = vmul.f32 %v147, %v136
    %v149 = vmul.f32 %v148, %v147
    %v150 = vmul.f32 0.5, %v149
    %v151 = vsub.f32 1.5, %v150
    %v152 = vmul.f32 %v147, %v151
    %vm153 = vweird.f32 %v136
    %vm154 = vweird.f32 %v147
    %vm155 = vmor %vm153, %vm154
    %v156 = vsel %vm155, %v147, %v152
    %v157 = vmul.f32 %v133, %v146
    %v158 = vmul.f32 %v134, %v156
    %v159 = vld [vmem:[%s6] sm:$0x1]
    %v161 = vperm.slane %v159, 0
    %v163 = vmul.f32 %v157, %v161
    %v164 = vmul.f32 %v158, %v161
    %v165 = vld [vmem:[%s7] sm:$0x1]
    %v167 = vperm.slane %v165, 0
    %v169 = vadd.f32 %v163, %v167
    %v170 = vadd.f32 %v164, %v167
    %171 = vst [vmem:[#allocation8] sm:$0xff] %v169
    %172 = vst [vmem:[#allocation8 + $0x8] sm:$0xff] %v170
    // Predicated region
    $region40: #{tpu_custom_call.1} parent=1 // pred_check
      _
    $region41: #{tpu_custom_call.1} parent=1 // pred_check_branch
      %174 = sbr.rel (0) target = $region43
    $region42: #{tpu_custom_call.1} parent=1 // pred_region
      %176 = vsyncadd [#allocation9], 0
      %s177 = sshll.u32 [#allocation8], 4
      %s178 = int_to_ptr.vmem [resolvable:$true] %s177
      %s179 = sshll.u32 %s8, 4
      %s180 = int_to_ptr.hbm [resolvable:$true] %s179
      %185 = dma.vmem_to_hbm [thread:$0]  %s178, 256, %s180, [#allocation9], 128, 128, 8
    $region43: #{tpu_custom_call.1} parent=1 // pred_fallthru
      _
    // Predicated region
    $region44: #{tpu_custom_call.1} parent=1 // pred_check
      _
    $region45: #{tpu_custom_call.1} parent=1 // pred_check_branch
      %187 = sbr.rel (0) target = $region47
    $region46: #{tpu_custom_call.1} parent=1 // pred_region
      %189 = dma.done [#allocation9], 256
    $region47: #{tpu_custom_call.1} parent=1 // pred_fallthru
      _
    %190 = vsyncpa [#allocation9], 1
  %191 = vsyncmov [#allocation4]
  %s192 = vpop.sfrf %191
  %p193 = scmp.eq.s32.totalorder %s192, 0
  %p194 = pneg %p193
  %196 = shalt.err (%p194)
  %s197 = scalar_lea.sflag [#allocation4], 1
  %198 = vsyncmov %s197
  %s199 = vpop.sfrf %198
  %p200 = scmp.eq.s32.totalorder %s199, 0
  %p201 = pneg %p200
  %203 = shalt.err (%p201)

</llo_original>
